<compile_context>
chip_gen: v6e
topology: v6e:2x2x1
jax: 0.10.0
libtpu: 0.0.40
codegen_flags: <defaults>
</compile_context>

<pallas_src>
import jax
import jax.numpy as jnp
from jax.experimental import pallas as pl
from jax.experimental.pallas import tpu as pltpu


def _round_up(x, m):
    return ((x + m - 1) // m) * m


def _cdiv(a, b):
    return (a + b - 1) // b


def _pointwise_conv_kernel(wt_ref, b_ref, x_ref, o_ref):
    # wt_ref: (Cout, Cin)     b_ref: (Cout, 1)
    # x_ref:  (Bb, Cin, T)    o_ref: (Bb, Cout, T)   -- T is the lane-dense spatial tile
    wt = wt_ref[...]
    bias = b_ref[...]
    bb = x_ref.shape[0]
    # Bb is a small static constant; the Python loop unrolls at trace time into
    # Bb independent MXU dots (MXU cost is negligible vs. DMA at these sizes).
    for b in range(bb):
        y = jnp.dot(wt, x_ref[b], preferred_element_type=jnp.float32)
        o_ref[b] = jnp.maximum(y + bias, 0.0).astype(o_ref.dtype)


def _plan_blocks(B, Cin, Cout, HW_pad, *, dtype_bytes=4,
                 vmem_work_budget=12 << 20, max_lanes=32768):
    """Pick (batch_block, spatial_tile).

    The spatial tile is always a multiple of 128 (lane-dense stores).  The
    double-buffered (input + output) working set per grid step is kept under
    `vmem_work_budget`, which stays below the smallest scoped-VMEM default
    across v5e/v6e/v7x, so no vmem_limit_bytes override is required.
    """
    per_lane_per_row = (Cin + Cout) * dtype_bytes * 2  # x + y tiles, double-buffered

    def lane_cap(bb):
        cap = vmem_work_budget // (per_lane_per_row * bb)
        cap = (cap // 128) * 128
        return max(128, min(cap, max_lanes))

    # Prefer pulling the whole batch into one block when HW is small: this
    # multiplies bytes-per-DMA-step by B and amortizes per-step overhead.
    bb = B
    if HW_pad > lane_cap(bb):
        bb = 1
    tile = min(lane_cap(bb), HW_pad)

    # If one maximal block would leave the grid with <4 steps on a *large*
    # problem, split the spatial axis so pipelining / megacore sharding have
    # something to overlap.  Tiny problems keep a single (cheap) step.
    step_bytes = bb * (Cin + Cout) * tile * dtype_bytes
    n_steps = _cdiv(B, bb) * _cdiv(HW_pad, tile)
    if n_steps < 4 and step_bytes > (4 << 20):
        tile = max(128, min(tile, _round_up(_cdiv(HW_pad, 4), 128)))

    return bb, tile


def pointwise_conv_relu_nchw(x, weight_t, bias_col):
    """x: (B, Cin, HW) f32, weight_t: (Cout, Cin) f32, bias_col: (Cout, 1) f32
    -> (B, Cout, HW) f32, computing relu(W^T @ x + b) per batch."""
    B, Cin, HW = x.shape
    Cout = weight_t.shape[0]

    # Pad the spatial axis to a multiple of 128 so every output block is
    # lane-dense (layout plumbing only; sliced off after the kernel).
    HW_pad = _round_up(HW, 128)
    if HW_pad != HW:
        x = jnp.pad(x, ((0, 0), (0, 0), (0, HW_pad - HW)))

    bb, tile = _plan_blocks(B, Cin, Cout, HW_pad)
    grid = (pl.cdiv(B, bb), pl.cdiv(HW_pad, tile))

    # NOTE: for large channel counts (Cin/Cout >= 128) one would add a K (Cin)
    # grid axis marked "arbitrary" with a VMEM f32 accumulator and tile Cout;
    # the synthetic inner module here has tiny channels, so the whole weight
    # stays VMEM-resident and the contraction is a single dot per block.
    y = pl.pallas_call(
        _pointwise_conv_kernel,
        out_shape=jax.ShapeDtypeStruct((B, Cout, HW_pad), jnp.float32),
        grid_spec=pltpu.PrefetchScalarGridSpec(
            num_scalar_prefetch=0,
            grid=grid,
            in_specs=[
                # Weight / bias: same block at every grid point -> VMEM resident.
                pl.BlockSpec((Cout, Cin), lambda b, s: (0, 0)),
                pl.BlockSpec((Cout, 1), lambda b, s: (0, 0)),
                # Input: Bb batches per block, lane-dense spatial tile.
                pl.BlockSpec((bb, Cin, tile), lambda b, s: (b, 0, s)),
            ],
            out_specs=pl.BlockSpec((bb, Cout, tile), lambda b, s: (b, 0, s)),
        ),
        compiler_params=pltpu.CompilerParams(
            # Fully parallel grid: no reduction axis; shards across both
            # TensorCores on v7x and keeps DMA/compute software pipelining
            # across spatial tiles when there is more than one step.
            dimension_semantics=("parallel", "parallel"),
        ),
    )(weight_t, bias_col, x)

    if HW_pad != HW:
        y = y[:, :, :HW]
    return y


class InnerModule:
    """Synthetic wrapped module: 1x1 Conv2d(Cin->Cout) + bias + ReLU, NCHW in/out."""

    def __init__(self, c_in, c_out, key):
        k_w, k_b = jax.random.split(key)
        # Deterministic parameter init (Kaiming-ish scale).
        self.weight = (
            jax.random.normal(k_w, (c_in, c_out), dtype=jnp.float32)
            * (2.0 / c_in) ** 0.5
        )
        self.bias = jax.random.normal(k_b, (c_out,), dtype=jnp.float32) * 0.01
        # Kernel-ready parameter layouts (Y = W^T @ X on NCHW-flattened input).
        self.weight_t = jnp.transpose(self.weight)       # (Cout, Cin)
        self.bias_col = self.bias.reshape(c_out, 1)      # (Cout, 1)

    def __call__(self, im_nchw):
        B, C, H, W = im_nchw.shape
        c_out = self.weight.shape[1]
        # NCHW -> (B, Cin, H*W): a free reshape, no transpose / HBM round trip.
        x = im_nchw.reshape(B, C, H * W)
        y = pointwise_conv_relu_nchw(x, self.weight_t, self.bias_col)
        # (B, Cout, H*W) -> NCHW: also a free reshape.
        return y.reshape(B, c_out, H, W)


class InputAsDict:
    """JAX/Pallas equivalent of the PyTorch InputAsDict wrapper."""

    def __init__(self, model):
        self.module = model

    def __call__(self, data_dict):
        if isinstance(data_dict, (jnp.ndarray, jax.Array)):
            im = data_dict
        else:
            im = data_dict["image"]
        return self.module(im)


if __name__ == "__main__":
    key = jax.random.PRNGKey(0)
    k_param, k_input = jax.random.split(key)

    B, C_in, H, W = 2, 4, 16, 16
    C_out = 8

    inner = InnerModule(C_in, C_out, k_param)
    wrapper = InputAsDict(inner)

    image = jax.random.normal(k_input, (B, C_in, H, W), dtype=jnp.float32)

    # Forward via dict input (the primary code path of InputAsDict).
    out_dict = wrapper({"image": image})
    # Forward via raw tensor input (the isinstance-Tensor code path).
    out_tensor = wrapper(image)

    jax.block_until_ready(out_dict)
    jax.block_until_ready(out_tensor)

    # Sanity: both paths must be identical, and shape must be NCHW (B, C_out, H, W).
    assert out_dict.shape == (B, C_out, H, W), out_dict.shape
    assert bool(jnp.allclose(out_dict, out_tensor)), "dict/tensor paths differ"

    # Cross-check kernel against pure-JAX reference (computed in NCHW layout).
    ref = jnp.einsum("oi,bis->bos", inner.weight_t, image.reshape(B, C_in, H * W))
    ref = jnp.maximum(ref + inner.bias_col[None, :, :], 0.0).reshape(B, C_out, H, W)
    assert bool(jnp.allclose(out_dict, ref, atol=1e-5, rtol=1e-5)), "kernel mismatch"

    print("KERNEL_OK")
</pallas_src>

<mosaic_0001>
module attributes {stable_mosaic.version = 11 : i64} {
  func.func @_pointwise_conv_kernel(%arg0: i32, %arg1: i32, %arg2: memref<8x4xf32, #tpu.memory_space<vmem>>, %arg3: memref<8x1xf32, #tpu.memory_space<vmem>>, %arg4: memref<2x4x256xf32, #tpu.memory_space<vmem>>, %arg5: memref<2x8x256xf32, #tpu.memory_space<vmem>>) attributes {dimension_semantics = [#tpu.dimension_semantics<parallel>, #tpu.dimension_semantics<parallel>], iteration_bounds = array<i64: 1, 1>, scalar_prefetch = 0 : i64, scratch_operands = 0 : i64, tpu.core_type = #tpu.core_type<tc>, window_params = [{pipeline_mode = #tpu.pipeline_mode<synchronous>, transform_indices = @transform_0, window_bounds = array<i64: 8, 4>}, {pipeline_mode = #tpu.pipeline_mode<synchronous>, transform_indices = @transform_1, window_bounds = array<i64: 8, 1>}, {transform_indices = @transform_2, window_bounds = array<i64: 2, 4, 256>}, {transform_indices = @transform_3, window_bounds = array<i64: 2, 8, 256>}]} {
    %c0 = arith.constant 0 : index
    %c0_0 = arith.constant 0 : index
    %0 = vector.load %arg2[%c0, %c0_0] : memref<8x4xf32, #tpu.memory_space<vmem>>, vector<8x4xf32>
    %c0_1 = arith.constant 0 : index
    %c0_2 = arith.constant 0 : index
    %1 = vector.load %arg3[%c0_1, %c0_2] : memref<8x1xf32, #tpu.memory_space<vmem>>, vector<8x1xf32>
    %c0_3 = arith.constant 0 : index
    %c0_4 = arith.constant 0 : index
    %c0_5 = arith.constant 0 : index
    %2 = vector.load %arg4[%c0_3, %c0_4, %c0_5] : memref<2x4x256xf32, #tpu.memory_space<vmem>>, vector<1x4x256xf32>
    %3 = vector.shape_cast %2 : vector<1x4x256xf32> to vector<4x256xf32>
    %cst = arith.constant dense<0.000000e+00> : vector<8x256xf32>
    %4 = tpu.matmul %0, %3, %cst {dimension_numbers = #tpu.dot_dimension_numbers<[1], [0], [0], [1], [0, 0, 1, 1], [], []>} : vector<8x4xf32>, vector<4x256xf32>, vector<8x256xf32> -> vector<8x256xf32>
    %5 = vector.broadcast %1 : vector<8x1xf32> to vector<8x256xf32>
    %6 = arith.addf %4, %5 : vector<8x256xf32>
    %cst_6 = arith.constant 0.000000e+00 : f32
    %7 = vector.broadcast %cst_6 : f32 to vector<8x256xf32>
    %8 = arith.maximumf %6, %7 : vector<8x256xf32>
    %c0_7 = arith.constant 0 : index
    %c0_8 = arith.constant 0 : index
    %c0_9 = arith.constant 0 : index
    %9 = vector.load %arg5[%c0_7, %c0_8, %c0_9] : memref<2x8x256xf32, #tpu.memory_space<vmem>>, vector<1x8x256xf32>
    %10 = vector.shape_cast %9 : vector<1x8x256xf32> to vector<8x256xf32>
    %11 = vector.shape_cast %8 : vector<8x256xf32> to vector<1x8x256xf32>
    tpu.vector_store %arg5[%c0_7, %c0_8, %c0_9], %11 {strides = array<i32>} : memref<2x8x256xf32, #tpu.memory_space<vmem>>, vector<1x8x256xf32>,
    %c1 = arith.constant 1 : index
    %c0_10 = arith.constant 0 : index
    %c0_11 = arith.constant 0 : index
    %12 = vector.load %arg4[%c1, %c0_10, %c0_11] : memref<2x4x256xf32, #tpu.memory_space<vmem>>, vector<1x4x256xf32>
    %13 = vector.shape_cast %12 : vector<1x4x256xf32> to vector<4x256xf32>
    %cst_12 = arith.constant dense<0.000000e+00> : vector<8x256xf32>
    %14 = tpu.matmul %0, %13, %cst_12 {dimension_numbers = #tpu.dot_dimension_numbers<[1], [0], [0], [1], [0, 0, 1, 1], [], []>} : vector<8x4xf32>, vector<4x256xf32>, vector<8x256xf32> -> vector<8x256xf32>
    %15 = vector.broadcast %1 : vector<8x1xf32> to vector<8x256xf32>
    %16 = arith.addf %14, %15 : vector<8x256xf32>
    %cst_13 = arith.constant 0.000000e+00 : f32
    %17 = vector.broadcast %cst_13 : f32 to vector<8x256xf32>
    %18 = arith.maximumf %16, %17 : vector<8x256xf32>
    %c1_14 = arith.constant 1 : index
    %c0_15 = arith.constant 0 : index
    %c0_16 = arith.constant 0 : index
    %19 = vector.load %arg5[%c1_14, %c0_15, %c0_16] : memref<2x8x256xf32, #tpu.memory_space<vmem>>, vector<1x8x256xf32>
    %20 = vector.shape_cast %19 : vector<1x8x256xf32> to vector<8x256xf32>
    %21 = vector.shape_cast %18 : vector<8x256xf32> to vector<1x8x256xf32>
    tpu.vector_store %arg5[%c1_14, %c0_15, %c0_16], %21 {strides = array<i32>} : memref<2x8x256xf32, #tpu.memory_space<vmem>>, vector<1x8x256xf32>,
    return
  }
  func.func @transform_0(%arg0: i32, %arg1: i32) -> (i32, i32) {
    %c0_i32 = arith.constant 0 : i32
    %c0_i32_0 = arith.constant 0 : i32
    %c0_i32_1 = arith.constant 0 : i32
    return %c0_i32, %c0_i32_0 : i32, i32
  }
  func.func @transform_1(%arg0: i32, %arg1: i32) -> (i32, i32) {
    %c0_i32 = arith.constant 0 : i32
    %c0_i32_0 = arith.constant 0 : i32
    %c0_i32_1 = arith.constant 0 : i32
    return %c0_i32, %c0_i32_0 : i32, i32
  }
  func.func @transform_2(%arg0: i32, %arg1: i32) -> (i32, i32, i32) {
    %c0_i32 = arith.constant 0 : i32
    %c0_i32_0 = arith.constant 0 : i32
    return %arg0, %c0_i32, %arg1 : i32, i32, i32
  }
  func.func @transform_3(%arg0: i32, %arg1: i32) -> (i32, i32, i32) {
    %c0_i32 = arith.constant 0 : i32
    %c0_i32_0 = arith.constant 0 : i32
    return %arg0, %c0_i32, %arg1 : i32, i32, i32
  }
}

</mosaic_0001>

<llo_original>
// kernel: tpu_custom_call.1
$region0: #{tpu_custom_call.1}
  #allocation0 [shape = 'u32[]', space=smem, size = 0x4, offset = 0x4, fixed_abs, tag = 'smem constant byte address 0x4 - core index']
  #allocation1 [shape = 'u32[144,128]{1,0:T(1,128)}', space=vmem, size = 0x12000, scoped, tag = 'internal scratch']
  %s0 = inlined_call_operand.vmem [shape: f32[8,4], index: 0, kind: input, shape index: {}]
  %s1 = inlined_call_operand.vmem [shape: f32[8,1], index: 1, kind: input, shape index: {}]
  %s2 = inlined_call_operand.vmem [shape: f32[2,4,256], index: 2, kind: input, shape index: {}]
  %s3 = inlined_call_operand.hbm [shape: f32[2,8,256], index: 3, kind: output, shape index: {}]
  %s4 = sld [smem:[#allocation0]]
  $region22: #{tpu_custom_call.1} parent=0
    _
  %s6 = ssub.s32 1, %s4
  %s7 = scalar_select 0, %s6, %s4
  $region1: #{tpu_custom_call.1} parent=0
    #allocation2 [shape = 'u8[16384]{0}', space=vmem, size = 0x4000, scoped, tag = 'output window, operand 0, single buffered']
    #allocation3 [shape = 's32[1]{0}', space=sflag, size = 0x4, scoped, tag = 'scoped memory for tpu_custom_call.1']
    %8 = vsyncpa [#allocation3], 0
    // Predicated region
    $region2: #{tpu_custom_call.1} parent=1 // pred_check
      _
    $region3: #{tpu_custom_call.1} parent=1 // pred_check_branch
      %10 = sbr.rel (0) target = $region5
    $region4: #{tpu_custom_call.1} parent=1 // pred_region
      _
    $region5: #{tpu_custom_call.1} parent=1 // pred_fallthru
      _
    // Predicated region
    $region6: #{tpu_custom_call.1} parent=1 // pred_check
      _
    $region7: #{tpu_custom_call.1} parent=1 // pred_check_branch
      %12 = sbr.rel (0) target = $region9
    $region8: #{tpu_custom_call.1} parent=1 // pred_region
      _
    $region9: #{tpu_custom_call.1} parent=1 // pred_fallthru
      _
    // Predicated region
    $region10: #{tpu_custom_call.1} parent=1 // pred_check
      _
    $region11: #{tpu_custom_call.1} parent=1 // pred_check_branch
      %14 = sbr.rel (0) target = $region13
    $region12: #{tpu_custom_call.1} parent=1 // pred_region
      _
    $region13: #{tpu_custom_call.1} parent=1 // pred_fallthru
      _
    %v15 = vld [vmem:[%s0] sm:$0xff]
    %v16 = vld [vmem:[%s1] sm:$0xff]
    %v17 = vld [vmem:[%s2] sm:$0xff]
    %19 = vset.pattern.permute.xlu0 0
    %20 = vperm.xlu0 %19, %v16
    %v21 = vpop.permute.xlu0 %20
    %v24 = vcombine.high %v17, %v17
    %vm25 = vcmask 31744
    %v27 = vsel %vm25, %v15, 0
    %vm29 = vcmask 1043456
    %v30 = vsel %vm29, %v17, 0
    %v32 = vsel %vm29, %v24, 0
    %34 = vmatprep.subr.mxu0 0.0
    %35 = vmatpush1.msra.mxu0 0.0
    %36 = vmatprep.subr.mxu0 0.0
    %37 = vmatpush1.msra.mxu0 0.0
    %38 = vmatprep.subr.mxu0 0.0
    %39 = vmatpush1.msra.mxu0 0.0
    %40 = vmatprep.subr.mxu0 0.0
    %41 = vmatpush1.msra.mxu0 0.0
    %42 = vmatprep.subr.mxu0 0.0
    %43 = vmatpush1.msra.mxu0 0.0
    %44 = vmatprep.subr.mxu0 0.0
    %45 = vmatpush1.msra.mxu0 0.0
    %46 = vmatprep.subr.mxu0 0.0
    %47 = vmatpush1.msra.mxu0 0.0
    %48 = vmatprep.subr.mxu0 0.0
    %49 = vmatpush1.msra.mxu0 0.0
    %50 = vmatprep.subr.mxu0 0.0
    %51 = vmatpush1.msra.mxu0 0.0
    %52 = vmatprep.subr.mxu0 0.0
    %53 = vmatpush1.msra.mxu0 0.0
    %54 = vmatprep.subr.mxu0 0.0
    %55 = vmatpush1.msra.mxu0 0.0
    %56 = vmatprep.subr.mxu0 0.0
    %57 = vmatpush1.msra.mxu0 0.0
    %58 = vmatprep.subr.mxu0 0.0
    %59 = vmatpush1.msra.mxu0 0.0
    %60 = vmatprep.subr.mxu0 0.0
    %61 = vmatpush1.msra.mxu0 0.0
    %62 = vmatprep.subr.mxu0 0.0
    %63 = vmatpush1.msra.mxu0 0.0
    %64 = vmatprep.subr.mxu0 %v32
    %65 = vmatpush1.msra.mxu0 %v30
    %66 = vmatprep.subr.mxu0 0.0
    %67 = vmatpush2.msra.mxu0 0.0
    %68 = vmatprep.subr.mxu0 0.0
    %69 = vmatpush2.msra.mxu0 0.0
    %70 = vmatprep.subr.mxu0 0.0
    %71 = vmatpush2.msra.mxu0 0.0
    %72 = vmatprep.subr.mxu0 0.0
    %73 = vmatpush2.msra.mxu0 0.0
    %74 = vmatprep.subr.mxu0 0.0
    %75 = vmatpush2.msra.mxu0 0.0
    %76 = vmatprep.subr.mxu0 0.0
    %77 = vmatpush2.msra.mxu0 0.0
    %78 = vmatprep.subr.mxu0 0.0
    %79 = vmatpush2.msra.mxu0 0.0
    %80 = vmatprep.subr.mxu0 0.0
    %81 = vmatpush2.msra.mxu0 0.0
    %82 = vmatprep.subr.mxu0 0.0
    %83 = vmatpush2.msra.mxu0 0.0
    %84 = vmatprep.subr.mxu0 0.0
    %85 = vmatpush2.msra.mxu0 0.0
    %86 = vmatprep.subr.mxu0 0.0
    %87 = vmatpush2.msra.mxu0 0.0
    %88 = vmatprep.subr.mxu0 0.0
    %89 = vmatpush2.msra.mxu0 0.0
    %90 = vmatprep.subr.mxu0 0.0
    %91 = vmatpush2.msra.mxu0 0.0
    %92 = vmatprep.subr.mxu0 0.0
    %93 = vmatpush2.msra.mxu0 0.0
    %94 = vmatprep.subr.mxu0 0.0
    %95 = vmatpush2.msra.mxu0 0.0
    %96 = vmatprep.subr.mxu0 0.0
    %97 = vmatpush2.msra.mxu0 0.0
    %98 = vmatprep.mubr.f32.mxu0 0.0
    %99 = vmatmul.mubr.f32.gmra.mxu0 %v27
    %v100 = vpop.f32.mrf.mxu0
    %v101 = vadd.f32 %v21, %v100
    %v102 = vpop.f32.mrf.mxu0
    %v103 = vadd.f32 %v21, %v102
    %104 = vdwg.mxu0
    %v105 = vmax.f32 %v101, 0.0
    %v106 = vmax.f32 %v103, 0.0
    %107 = vst [vmem:[#allocation2] sm:$0xff] %v105
    %108 = vst [vmem:[#allocation2 + $0x8] sm:$0xff] %v106
    %s109 = scalar_lea.vmem %s2, 8
    %v110 = vld [vmem:[%s109] sm:$0xff]
    %v112 = vcombine.high %v110, %v110
    %v113 = vsel %vm29, %v110, 0
    %v115 = vsel %vm29, %v112, 0
    %117 = vmatprep.subr.mxu0 0.0
    %118 = vmatpush1.msra.mxu0 0.0
    %119 = vmatprep.subr.mxu0 0.0
    %120 = vmatpush1.msra.mxu0 0.0
    %121 = vmatprep.subr.mxu0 0.0
    %122 = vmatpush1.msra.mxu0 0.0
    %123 = vmatprep.subr.mxu0 0.0
    %124 = vmatpush1.msra.mxu0 0.0
    %125 = vmatprep.subr.mxu0 0.0
    %126 = vmatpush1.msra.mxu0 0.0
    %127 = vmatprep.subr.mxu0 0.0
    %128 = vmatpush1.msra.mxu0 0.0
    %129 = vmatprep.subr.mxu0 0.0
    %130 = vmatpush1.msra.mxu0 0.0
    %131 = vmatprep.subr.mxu0 0.0
    %132 = vmatpush1.msra.mxu0 0.0
    %133 = vmatprep.subr.mxu0 0.0
    %134 = vmatpush1.msra.mxu0 0.0
    %135 = vmatprep.subr.mxu0 0.0
    %136 = vmatpush1.msra.mxu0 0.0
    %137 = vmatprep.subr.mxu0 0.0
    %138 = vmatpush1.msra.mxu0 0.0
    %139 = vmatprep.subr.mxu0 0.0
    %140 = vmatpush1.msra.mxu0 0.0
    %141 = vmatprep.subr.mxu0 0.0
    %142 = vmatpush1.msra.mxu0 0.0
    %143 = vmatprep.subr.mxu0 0.0
    %144 = vmatpush1.msra.mxu0 0.0
    %145 = vmatprep.subr.mxu0 0.0
    %146 = vmatpush1.msra.mxu0 0.0
    %147 = vmatprep.subr.mxu0 %v115
    %148 = vmatpush1.msra.mxu0 %v113
    %149 = vmatprep.subr.mxu0 0.0
    %150 = vmatpush2.msra.mxu0 0.0
    %151 = vmatprep.subr.mxu0 0.0
    %152 = vmatpush2.msra.mxu0 0.0
    %153 = vmatprep.subr.mxu0 0.0
    %154 = vmatpush2.msra.mxu0 0.0
    %155 = vmatprep.subr.mxu0 0.0
    %156 = vmatpush2.msra.mxu0 0.0
    %157 = vmatprep.subr.mxu0 0.0
    %158 = vmatpush2.msra.mxu0 0.0
    %159 = vmatprep.subr.mxu0 0.0
    %160 = vmatpush2.msra.mxu0 0.0
    %161 = vmatprep.subr.mxu0 0.0
    %162 = vmatpush2.msra.mxu0 0.0
    %163 = vmatprep.subr.mxu0 0.0
    %164 = vmatpush2.msra.mxu0 0.0
    %165 = vmatprep.subr.mxu0 0.0
    %166 = vmatpush2.msra.mxu0 0.0
    %167 = vmatprep.subr.mxu0 0.0
    %168 = vmatpush2.msra.mxu0 0.0
    %169 = vmatprep.subr.mxu0 0.0
    %170 = vmatpush2.msra.mxu0 0.0
    %171 = vmatprep.subr.mxu0 0.0
    %172 = vmatpush2.msra.mxu0 0.0
    %173 = vmatprep.subr.mxu0 0.0
    %174 = vmatpush2.msra.mxu0 0.0
    %175 = vmatprep.subr.mxu0 0.0
    %176 = vmatpush2.msra.mxu0 0.0
    %177 = vmatprep.subr.mxu0 0.0
    %178 = vmatpush2.msra.mxu0 0.0
    %179 = vmatprep.subr.mxu0 0.0
    %180 = vmatpush2.msra.mxu0 0.0
    %181 = vmatprep.mubr.f32.mxu0 0.0
    %182 = vmatmul.mubr.f32.gmra.mxu0 %v27
    %v183 = vpop.f32.mrf.mxu0
    %v184 = vadd.f32 %v21, %v183
    %v185 = vpop.f32.mrf.mxu0
    %v186 = vadd.f32 %v21, %v185
    %187 = vdwg.mxu0
    %v188 = vmax.f32 %v184, 0.0
    %v189 = vmax.f32 %v186, 0.0
    %s190 = scalar_lea.vmem [#allocation2], 16
    %191 = vst [vmem:[%s190] sm:$0xff] %v188
    %192 = vst [vmem:[%s190 + $0x8] sm:$0xff] %v189
    // Predicated region
    $region14: #{tpu_custom_call.1} parent=1 // pred_check
      _
    $region15: #{tpu_custom_call.1} parent=1 // pred_check_branch
      %194 = sbr.rel (0) target = $region17
    $region16: #{tpu_custom_call.1} parent=1 // pred_region
      %s196 = ssub.s32 512, 512
      %197 = vsyncadd [#allocation3], %s196
      %s198 = sshll.u32 [#allocation2], 4
      %s199 = int_to_ptr.vmem [resolvable:$true] %s198
      %204 = dma.vmem_to_hbm [thread:$0]  %s199, 512, %s3, [#allocation3], 256, 256, 16
    $region17: #{tpu_custom_call.1} parent=1 // pred_fallthru
      _
    // Predicated region
    $region18: #{tpu_custom_call.1} parent=1 // pred_check
      _
    $region19: #{tpu_custom_call.1} parent=1 // pred_check_branch
      %206 = sbr.rel (0) target = $region21
    $region20: #{tpu_custom_call.1} parent=1 // pred_region
      %207 = dma.done [#allocation3], 512
    $region21: #{tpu_custom_call.1} parent=1 // pred_fallthru
      _
    %208 = vsyncpa [#allocation3], 1

</llo_original>
